<compile_context>
chip_gen: v5e
topology: v5e:2x2
jax: 0.10.0
libtpu: 0.0.40
codegen_flags: <defaults>
</compile_context>

<pallas_src>
import functools

import jax
import jax.numpy as jnp
from jax.experimental import pallas as pl
from jax.experimental.pallas import tpu as pltpu

# Module-level constants from the PyTorch file.
T_REDUCE = 8
TIMESTEP = 10
MAX_1 = T_REDUCE / TIMESTEP          # 0.8

LANES = 128
MIN_GRID_STEPS = 8                   # pipeline overlap + megacore occupancy


def _round_up(a: int, b: int) -> int:
    return -(-a // b) * b


def _sublane_multiple(dtype) -> int:
    # Minimum sublane tiling: 8 for 32-bit, 16 for 16-bit, 32 for 8-bit dtypes.
    return 8 * (4 // jnp.dtype(dtype).itemsize)


def _new_spike_kernel(x_ref, b_ref, o_ref, *, T: int, theta: float,
                      inv_theta: float):
    """One lane-dense (tile_rows, 128) tile.

    Flat element layout: flat index f = neuron * T + t, so lane j of a row
    holds (neuron = (row*128 + j) // T, slot t = j % T).  This holds because
    T divides 128 and the flat buffer starts at a neuron boundary.
    """
    x = x_ref[...].astype(jnp.float32)                          # (TR, 128)

    # Segmented sum over aligned groups of T consecutive lanes, in-group
    # broadcast, and the 1/T rate scaling — all fused into one MXU matmul
    # against the constant block-diagonal (1/T) matrix.  Each output row only
    # mixes lanes of the SAME input row, so garbage rows of a partial last
    # block stay confined to (masked-out) garbage output rows.
    r = jnp.dot(x, b_ref[...], preferred_element_type=jnp.float32)  # (TR, 128)

    # Closed-form integrate-and-fire with soft reset (= catCuda.getSpikes) for
    # a constant input r: after t steps the neuron has fired
    #   k_t = clip(floor(t*r/theta), 0, t)
    # times, and it fires at step t+1 iff (t+1)*r - theta*k_t >= theta.
    lane = jax.lax.broadcasted_iota(jnp.int32, (1, LANES), 1)   # 0..127
    slot = (lane & (T - 1)).astype(jnp.float32)                 # t = 0..T-1
    a = slot * r
    k = jnp.floor(a * inv_theta)
    k = jnp.minimum(jnp.maximum(k, 0.0), slot)
    pre = (a + r) - k * theta
    o_ref[...] = jnp.where(pre >= theta, 1.0, 0.0).astype(o_ref.dtype)


@functools.partial(jax.jit, static_argnames=("T", "threshold", "tile_rows"))
def new_spike_low(x, *, T: int = T_REDUCE, threshold: float = 1.0,
                  tile_rows: int = 8192):
    """Forward pass of NewSpike_low: per-neuron rate over the trailing time
    axis, then a T-step {0,1} spike train (float32, same shape as x)."""
    if x.ndim != 5:
        raise ValueError(f"expected 5-D (N, C, H, W, T) input, got {x.shape}")
    if x.shape[-1] != T:
        raise ValueError(f"trailing time dim {x.shape[-1]} != T={T}")
    if (T & (T - 1)) or (LANES % T):
        # TODO(synk): non power-of-two T needs a different in-lane reduction.
        raise NotImplementedError("T must be a power of two dividing 128")

    theta = (MAX_1 - 0.001) / float(threshold)
    inv_theta = 1.0 / theta

    orig_shape = x.shape
    # Keep f32/bf16 inputs in their native dtype (no extra HBM upcast pass);
    # the kernel upcasts on load.  Other dtypes fall back to f32.
    if x.dtype not in (jnp.dtype(jnp.float32), jnp.dtype(jnp.bfloat16)):
        x = x.astype(jnp.float32)
    flat = x.reshape(-1)                 # contiguous view, no data movement
    total = flat.shape[0]

    # Lane-dense (rows, 128) view.  128 % T == 0, so every row starts at a
    # neuron boundary and holds 128/T whole neurons.
    pad = (-total) % LANES
    if pad:
        # TODO(synk): rare cliff (needs N*C*H*W % (128//T) != 0 — never for the
        # conv feature maps this module sees): jnp.pad and the trailing slice
        # each cost one full HBM copy.  Padded "ghost" neurons read zeros, emit
        # zeros and are sliced off again.
        flat = jnp.pad(flat, (0, pad))
    rows = flat.shape[0] // LANES
    slab = flat.reshape(rows, LANES)

    # Tile selection: multi-MiB blocks for HBM-roofline streaming (4 MiB at the
    # default tile_rows=8192 for f32), cdiv grid with a masked partial last
    # block, and a target of >= MIN_GRID_STEPS grid steps so the pipeline has
    # steady-state overlap and both TensorCores get work.
    g = _sublane_multiple(slab.dtype)
    if rows <= g:
        tr = rows                        # single tiny block == full array
    else:
        tr = min(int(tile_rows), _round_up(pl.cdiv(rows, MIN_GRID_STEPS), g))
        tr = max(g, (tr // g) * g)
    grid = (pl.cdiv(rows, tr),)

    # Constant block-diagonal (1/T) reduction+broadcast matrix; 64 KiB, kept
    # resident in VMEM (same block index every grid step -> fetched once).
    group = jnp.arange(LANES, dtype=jnp.int32) // T
    bmat = jnp.where(group[:, None] == group[None, :],
                     1.0 / T, 0.0).astype(jnp.float32)

    kernel = functools.partial(_new_spike_kernel, T=T, theta=theta,
                               inv_theta=inv_theta)

    out_slab = pl.pallas_call(
        kernel,
        out_shape=jax.ShapeDtypeStruct((rows, LANES), jnp.float32),
        grid_spec=pltpu.PrefetchScalarGridSpec(
            num_scalar_prefetch=0,
            grid=grid,
            in_specs=[pl.BlockSpec((tr, LANES), lambda i: (i, 0)),
                      pl.BlockSpec((LANES, LANES), lambda i: (0, 0))],
            out_specs=pl.BlockSpec((tr, LANES), lambda i: (i, 0)),
        ),
        compiler_params=pltpu.CompilerParams(
            dimension_semantics=("parallel",),
            # 2 in + 2 out double-buffered 4 MiB blocks + matmul result +
            # elementwise temporaries; fits v7x (64 MiB) with headroom and is
            # trivially safe on v5e/v6e (128 MiB).
            vmem_limit_bytes=48 * 1024 * 1024,
        ),
    )(slab, bmat)

    out = out_slab.reshape(-1)
    if pad:
        out = out[:total]
    return out.reshape(orig_shape)


def new_spike_low_ref(x, *, T: int = T_REDUCE, threshold: float = 1.0):
    """Pure-JAX closed-form reference (same IF math; reduction via jnp.sum, so
    float accumulation order may differ from the kernel's MXU matmul)."""
    x = x.astype(jnp.float32)
    theta = (MAX_1 - 0.001) / float(threshold)
    inv_theta = 1.0 / theta
    r = jnp.sum(x, axis=-1, keepdims=True) * (1.0 / T)          # (..., 1)
    t = jnp.arange(T, dtype=jnp.float32)                        # (T,)
    a = t * r
    k = jnp.floor(a * inv_theta)
    k = jnp.minimum(jnp.maximum(k, 0.0), t)
    pre = (a + r) - k * theta
    return jnp.where(pre >= theta, 1.0, 0.0).astype(jnp.float32)


def new_spike_low_seq_ref(x, *, T: int = T_REDUCE, threshold: float = 1.0):
    """Direct emulation of catCuda.getSpikes: sequential integrate-and-fire
    with soft reset, driven by the constant rate r for T steps."""
    x = x.astype(jnp.float32)
    theta = (MAX_1 - 0.001) / float(threshold)
    r = jnp.sum(x, axis=4) / T
    v = jnp.zeros_like(r)
    spikes = []
    for _ in range(T):
        v = v + r
        fire = v >= theta
        spikes.append(jnp.where(fire, 1.0, 0.0))
        v = jnp.where(fire, v - theta, v)
    return jnp.stack(spikes, axis=-1).astype(jnp.float32)


if __name__ == "__main__":
    key = jax.random.PRNGKey(0)
    # Small shapes consistent with the module: NCHW feature map with a trailing
    # spike-time axis of length T_reduce = 8.
    x = jax.random.normal(key, (2, 4, 16, 16, T_REDUCE), dtype=jnp.float32)

    out = jax.block_until_ready(new_spike_low(x))
    assert out.shape == x.shape and out.dtype == jnp.float32

    # 1) Closed-form reference.  The kernel sums on the MXU, the reference via
    #    jnp.sum, so only spikes sitting within a rounding error of a threshold
    #    multiple could differ -> tolerate a tiny flip fraction.
    ref = new_spike_low_ref(x)
    frac_cf = float(jnp.mean((out != ref).astype(jnp.float32)))
    assert frac_cf < 1e-3, f"kernel vs closed-form reference: frac={frac_cf}"

    # 2) Semantics check: direct emulation of catCuda.getSpikes' sequential
    #    integrate-and-fire loop (mathematically identical; only exact float32
    #    threshold ties could ever differ).
    seq = new_spike_low_seq_ref(x)
    frac_seq = float(jnp.mean((out != seq).astype(jnp.float32)))
    assert frac_seq < 1e-3, f"kernel vs IF emulation: frac={frac_seq}"

    print("KERNEL_OK")
</pallas_src>

<mosaic_0001>
module attributes {stable_mosaic.version = 11 : i64} {
  func.func @_new_spike_kernel(%arg0: i32, %arg1: memref<16x128xf32, #tpu.memory_space<vmem>>, %arg2: memref<128x128xf32, #tpu.memory_space<vmem>>, %arg3: memref<16x128xf32, #tpu.memory_space<vmem>>) attributes {dimension_semantics = [#tpu.dimension_semantics<parallel>], iteration_bounds = array<i64: 8>, scalar_prefetch = 0 : i64, scratch_operands = 0 : i64, tpu.core_type = #tpu.core_type<tc>, window_params = [{transform_indices = @transform_0, window_bounds = array<i64: 16, 128>}, {pipeline_mode = #tpu.pipeline_mode<synchronous>, transform_indices = @transform_1, window_bounds = array<i64: 128, 128>}, {transform_indices = @transform_2, window_bounds = array<i64: 16, 128>}]} {
    %c0 = arith.constant 0 : index
    %c0_0 = arith.constant 0 : index
    %0 = vector.load %arg1[%c0, %c0_0] : memref<16x128xf32, #tpu.memory_space<vmem>>, vector<16x128xf32>
    %c0_1 = arith.constant 0 : index
    %c0_2 = arith.constant 0 : index
    %1 = vector.load %arg2[%c0_1, %c0_2] : memref<128x128xf32, #tpu.memory_space<vmem>>, vector<128x128xf32>
    %cst = arith.constant dense<0.000000e+00> : vector<16x128xf32>
    %2 = tpu.matmul %0, %1, %cst {dimension_numbers = #tpu.dot_dimension_numbers<[1], [0], [0], [1], [0, 0, 1, 1], [], []>} : vector<16x128xf32>, vector<128x128xf32>, vector<16x128xf32> -> vector<16x128xf32>
    %3 = tpu.iota {dimensions = array<i32: 1>} : vector<1x128xi32>
    %c7_i32 = arith.constant 7 : i32
    %4 = vector.broadcast %c7_i32 : i32 to vector<1x128xi32>
    %5 = arith.andi %3, %4 : vector<1x128xi32>
    %6 = arith.sitofp %5 : vector<1x128xi32> to vector<1x128xf32>
    %7 = vector.broadcast %6 : vector<1x128xf32> to vector<16x128xf32>
    %8 = arith.mulf %7, %2 : vector<16x128xf32>
    %cst_3 = arith.constant 1.2515645 : f32
    %9 = vector.broadcast %cst_3 : f32 to vector<16x128xf32>
    %10 = arith.mulf %8, %9 : vector<16x128xf32>
    %11 = math.floor %10 : vector<16x128xf32>
    %cst_4 = arith.constant 0.000000e+00 : f32
    %12 = vector.broadcast %cst_4 : f32 to vector<16x128xf32>
    %13 = arith.maximumf %11, %12 : vector<16x128xf32>
    %14 = vector.broadcast %6 : vector<1x128xf32> to vector<16x128xf32>
    %15 = arith.minimumf %13, %14 : vector<16x128xf32>
    %16 = arith.addf %8, %2 : vector<16x128xf32>
    %cst_5 = arith.constant 7.990000e-01 : f32
    %17 = vector.broadcast %cst_5 : f32 to vector<16x128xf32>
    %18 = arith.mulf %15, %17 : vector<16x128xf32>
    %19 = arith.subf %16, %18 : vector<16x128xf32>
    %cst_6 = arith.constant 7.990000e-01 : f32
    %20 = vector.broadcast %cst_6 : f32 to vector<16x128xf32>
    %21 = arith.cmpf oge, %19, %20 : vector<16x128xf32>
    %cst_7 = arith.constant 1.000000e+00 : f32
    %cst_8 = arith.constant 0.000000e+00 : f32
    %22 = vector.broadcast %cst_7 : f32 to vector<16x128xf32>
    %23 = vector.broadcast %cst_8 : f32 to vector<16x128xf32>
    %24 = arith.select %21, %22, %23 : vector<16x128xi1>, vector<16x128xf32>
    %c0_9 = arith.constant 0 : index
    %c0_10 = arith.constant 0 : index
    %25 = vector.load %arg3[%c0_9, %c0_10] : memref<16x128xf32, #tpu.memory_space<vmem>>, vector<16x128xf32>
    tpu.vector_store %arg3[%c0_9, %c0_10], %24 {strides = array<i32>} : memref<16x128xf32, #tpu.memory_space<vmem>>, vector<16x128xf32>,
    return
  }
  func.func @transform_0(%arg0: i32) -> (i32, i32) {
    %c0_i32 = arith.constant 0 : i32
    %c0_i32_0 = arith.constant 0 : i32
    return %arg0, %c0_i32 : i32, i32
  }
  func.func @transform_1(%arg0: i32) -> (i32, i32) {
    %c0_i32 = arith.constant 0 : i32
    %c0_i32_0 = arith.constant 0 : i32
    %c0_i32_1 = arith.constant 0 : i32
    return %c0_i32, %c0_i32_0 : i32, i32
  }
  func.func @transform_2(%arg0: i32) -> (i32, i32) {
    %c0_i32 = arith.constant 0 : i32
    %c0_i32_0 = arith.constant 0 : i32
    return %arg0, %c0_i32 : i32, i32
  }
}

</mosaic_0001>

<llo_original>
// kernel: new_spike_low.1
$region0: #{new_spike_low.1}
  #allocation0 [shape = 'u32[]', space=smem, size = 0x4, offset = 0x4, fixed_abs, tag = 'smem constant byte address 0x4 - core index']
  #allocation1 [shape = 'u32[72,128]{1,0:T(1,128)}', space=vmem, size = 0x9000, scoped, tag = 'internal scratch']
  %s0 = inlined_call_operand.vmem [shape: f32[128,128], index: 0, kind: input, shape index: {}]
  %s1 = inlined_call_operand.vmem [shape: f32[128,128], index: 1, kind: input, shape index: {}]
  %s2 = inlined_call_operand.vmem [shape: f32[128,128], index: 2, kind: output, shape index: {}]
  %s3 = sld [smem:[#allocation0]]
  $region41: #{new_spike_low.1} parent=0
    _
  %s5 = ssub.s32 1, %s3
  %s6 = scalar_select 0, %s5, %s3
  loop: start=0, step=1, limit=10
  $region2: #{new_spike_low.1} parent=0 // loop_pre_header
    _
  $region3: #{new_spike_low.1} parent=0 // loop_header
    %s8 = sphi 0, %s12
    %p9 = scmp.ge.s32.totalorder %s8, 10
    %s18 = sphi 0, %s20
    %s21 = sphi 0, %s18
    %s22 = sphi 0, %s21
    %s38 = sphi 0, %s22
    %s42 = sphi 0, %s42
    %s44 = sphi 0, %s42
    %s45 = sphi 0, %s44
    %s59 = sphi 0, %s45
    %s65 = sphi 0, %s67
    %s68 = sphi 0, %s65
    %s69 = sphi 0, %s68
    %s85 = sphi 0, %s69
  $region4: #{new_spike_low.1} parent=0 // loop_header_branch
    %11 = sbr.rel (%p9) target = $region8
  $region5: #{new_spike_low.1} parent=0 // loop_body
    %s13 = ssub.s32 %s8, 1
    %s14 = ssub.s32 %s8, 2
    %s15 = sadd.s32 %s8, 1
    %s16 = ssub.s32 %s8, %s15
    %p17 = scmp.eq.s32.totalorder %s16, 0
    %s19 = sadd.s32 %s18, 1
    %s20 = scalar_select %p17, %s18, %s19
    %p23 = pneg %p17
    %p24 = scmp.eq.s32.totalorder %s8, 7
    %p25 = por %p23, %p24
    %p26 = scmp.ne.s32.totalorder %s18, %s21
    %p27 = scmp.eq.s32.totalorder %s8, 0
    %p28 = por %p26, %p27
    %p29 = scmp.ne.s32.totalorder %s18, %s21
    %p30 = scmp.eq.s32.totalorder %s13, 7
    %p31 = por %p29, %p30
    %p32 = scmp.ne.s32.totalorder %s21, %s22
    %p33 = scmp.eq.s32.totalorder %s13, 0
    %p34 = por %p32, %p33
    %p35 = scmp.ne.s32.totalorder %s21, %s22
    %p36 = scmp.eq.s32.totalorder %s14, 7
    %p37 = por %p35, %p36
    %p39 = scmp.ne.s32.totalorder %s22, %s38
    %p40 = scmp.eq.s32.totalorder %s14, 0
    %p41 = por %p39, %p40
    %s43 = sadd.s32 %s42, 1
    %p46 = scmp.eq.s32.totalorder %s8, 7
    %p47 = scmp.ne.s32.totalorder %s42, %s44
    %p48 = scmp.eq.s32.totalorder %s8, 0
    %p49 = por %p47, %p48
    %p50 = scmp.ne.s32.totalorder %s42, %s44
    %p51 = scmp.eq.s32.totalorder %s13, 7
    %p52 = por %p50, %p51
    %p53 = scmp.ne.s32.totalorder %s44, %s45
    %p54 = scmp.eq.s32.totalorder %s13, 0
    %p55 = por %p53, %p54
    %p56 = scmp.ne.s32.totalorder %s44, %s45
    %p57 = scmp.eq.s32.totalorder %s14, 7
    %p58 = por %p56, %p57
    %p60 = scmp.ne.s32.totalorder %s45, %s59
    %p61 = scmp.eq.s32.totalorder %s14, 0
    %p62 = por %p60, %p61
    %s63 = ssub.s32 %s8, %s15
    %p64 = scmp.eq.s32.totalorder %s63, 0
    %s66 = sadd.s32 %s65, 1
    %s67 = scalar_select %p64, %s65, %s66
    %p70 = pneg %p64
    %p71 = scmp.eq.s32.totalorder %s8, 7
    %p72 = por %p70, %p71
    %p73 = scmp.ne.s32.totalorder %s65, %s68
    %p74 = scmp.eq.s32.totalorder %s8, 0
    %p75 = por %p73, %p74
    %p76 = scmp.ne.s32.totalorder %s65, %s68
    %p77 = scmp.eq.s32.totalorder %s13, 7
    %p78 = por %p76, %p77
    %p79 = scmp.ne.s32.totalorder %s68, %s69
    %p80 = scmp.eq.s32.totalorder %s13, 0
    %p81 = por %p79, %p80
    %p82 = scmp.ne.s32.totalorder %s68, %s69
    %p83 = scmp.eq.s32.totalorder %s14, 7
    %p84 = por %p82, %p83
    %p86 = scmp.ne.s32.totalorder %s69, %s85
    %p87 = scmp.eq.s32.totalorder %s14, 0
    %p88 = por %p86, %p87
    %p89 = scmp.le.s32.totalorder 1, %s8
    %p90 = scmp.lt.s32.totalorder %s8, 9
    %p91 = pnand %p89, %p90
    %p92 = pneg %p91
    // Predicated region
    $region9: #{new_spike_low.1} parent=5 // pred_check
      _
    $region10: #{new_spike_low.1} parent=5 // pred_check_branch
      %94 = sbr.rel (%p91) target = $region12
    $region11: #{new_spike_low.1} parent=5 // pred_region
      %s95 = ssub.s32 %s8, 1
      // Predicated region
      $region13: #{new_spike_low.1} parent=11 // pred_check
        %p96 = pneg %p55
      $region14: #{new_spike_low.1} parent=11 // pred_check_branch
        %98 = sbr.rel (%p96) target = $region16
      $region15: #{new_spike_low.1} parent=11 // pred_region
        _
      $region16: #{new_spike_low.1} parent=11 // pred_fallthru
        _
    $region12: #{new_spike_low.1} parent=5 // pred_fallthru
      _
    %p99 = scmp.lt.s32.totalorder %s8, 8
    // Predicated region
    $region17: #{new_spike_low.1} parent=5 // pred_check
      %p100 = pneg %p99
    $region18: #{new_spike_low.1} parent=5 // pred_check_branch
      %102 = sbr.rel (%p100) target = $region20
    $region19: #{new_spike_low.1} parent=5 // pred_region
      // Predicated region
      $region21: #{new_spike_low.1} parent=19 // pred_check
        %p103 = pneg %p28
      $region22: #{new_spike_low.1} parent=19 // pred_check_branch
        %105 = sbr.rel (%p103) target = $region24
      $region23: #{new_spike_low.1} parent=19 // pred_region
        %s106 = smul.u32 2, %s8
        %p107 = scmp.lt.s32.totalorder %s106, 15
        %s108 = scalar_select %p107, %s106, 15
        %s109 = smul.addr %s108, 8
        %s110 = scalar_lea.vmem %s0, %s109
        %s111 = smul.u32 2, %s8
      $region24: #{new_spike_low.1} parent=19 // pred_fallthru
        _
    $region20: #{new_spike_low.1} parent=5 // pred_fallthru
      _
    %p112 = scmp.le.s32.totalorder 1, %s8
    %p113 = scmp.lt.s32.totalorder %s8, 9
    %p114 = pnand %p112, %p113
    %p115 = pneg %p114
    // Predicated region
    $region25: #{new_spike_low.1} parent=5 // pred_check
      _
    $region26: #{new_spike_low.1} parent=5 // pred_check_branch
      %117 = sbr.rel (%p114) target = $region28
    $region27: #{new_spike_low.1} parent=5 // pred_region
      %s118 = ssub.s32 %s8, 1
      %s119 = smul.u32 2, %s13
      %p120 = scmp.lt.s32.totalorder %s119, 15
      %s121 = scalar_select %p120, %s119, 15
      %s122 = smul.addr %s121, 8
      %s123 = scalar_lea.vmem %s0, %s122
      %p124 = pneg %p34
      %p125 = pneg %p31
      %p126 = pneg %p55
      %p127 = pneg %p52
      %p128 = pneg %p81
      %p129 = pneg %p78
      %s130 = smul.u32 2, %s13
      %p131 = scmp.lt.s32.totalorder %s130, 15
      %s132 = scalar_select %p131, %s130, 15
      %s133 = smul.addr %s132, 8
      %s134 = scalar_lea.vmem %s2, %s133
      %s135 = smul.u32 2, %s13
      %p136 = scmp.lt.s32.totalorder %s135, 15
      %s137 = scalar_select %p136, %s135, 15
      %s138 = smul.addr %s137, 8
      %s139 = scalar_lea.vmem %s0, %s138
      %s140 = smul.u32 2, %s13
      %s141 = smul.u32 2, %s13
      %p142 = scmp.lt.s32.totalorder %s141, 15
      %s143 = scalar_select %p142, %s141, 15
      %s144 = smul.addr %s143, 8
      %s145 = scalar_lea.vmem %s2, %s144
      %s146 = smul.u32 2, %s13
      %v147 = vld [vmem:[%s139] sm:$0xff]
      %v148 = vld [vmem:[%s139 + $0x8] sm:$0xff]
      %v149 = vld [vmem:[%s1] sm:$0xff]
      %v150 = vld [vmem:[%s1 + $0x8] sm:$0xff]
      %v151 = vld [vmem:[%s1 + $0x10] sm:$0xff]
      %v152 = vld [vmem:[%s1 + $0x18] sm:$0xff]
      %v153 = vld [vmem:[%s1 + $0x20] sm:$0xff]
      %v154 = vld [vmem:[%s1 + $0x28] sm:$0xff]
      %v155 = vld [vmem:[%s1 + $0x30] sm:$0xff]
      %v156 = vld [vmem:[%s1 + $0x38] sm:$0xff]
      %v157 = vld [vmem:[%s1 + $0x40] sm:$0xff]
      %v158 = vld [vmem:[%s1 + $0x48] sm:$0xff]
      %v159 = vld [vmem:[%s1 + $0x50] sm:$0xff]
      %v160 = vld [vmem:[%s1 + $0x58] sm:$0xff]
      %v161 = vld [vmem:[%s1 + $0x60] sm:$0xff]
      %v162 = vld [vmem:[%s1 + $0x68] sm:$0xff]
      %v163 = vld [vmem:[%s1 + $0x70] sm:$0xff]
      %v164 = vld [vmem:[%s1 + $0x78] sm:$0xff]
      %165 = vmatpush.msra.mxu0 %v164
      %166 = vmatpush.msra.mxu0 %v163
      %167 = vmatpush.msra.mxu0 %v162
      %168 = vmatpush.msra.mxu0 %v161
      %169 = vmatpush.msra.mxu0 %v160
      %170 = vmatpush.msra.mxu0 %v159
      %171 = vmatpush.msra.mxu0 %v158
      %172 = vmatpush.msra.mxu0 %v157
      %173 = vmatpush.msra.mxu0 %v156
      %174 = vmatpush.msra.mxu0 %v155
      %175 = vmatpush.msra.mxu0 %v154
      %176 = vmatpush.msra.mxu0 %v153
      %177 = vmatpush.msra.mxu0 %v152
      %178 = vmatpush.msra.mxu0 %v151
      %179 = vmatpush.msra.mxu0 %v150
      %180 = vmatpush.msra.mxu0 %v149
      %181 = vmatmul.f32.gmra.mxu0 %v147
      %v182 = vpop.f32.mrf.mxu0
      %v183 = vadd.f32 0.0, %v182
      %184 = vmatmul.f32.gmra.mxu0 %v148
      %v185 = vpop.f32.mrf.mxu0
      %v186 = vadd.f32 0.0, %v185
      %187 = vdwg.mxu0
      %v188 = vlaneseq
      %v189 = vand.u32 %v188, 127
      %v190 = vand.u32 %v189, 7
      %v191 = vcvt.s32.f32 %v190
      %v192 = vmul.f32 %v191, %v183
      %v193 = vmul.f32 %v191, %v186
      %v194 = vmul.f32 %v192, 1.2515645
      %v195 = vmul.f32 %v193, 1.2515645
      %v196 = vfloor.f32 %v194
      %v197 = vfloor.f32 %v195
      %v198 = vmax.f32 %v196, 0.0
      %v199 = vmax.f32 %v197, 0.0
      %v200 = vmin.f32 %v198, %v191
      %v201 = vmin.f32 %v199, %v191
      %v202 = vadd.f32 %v192, %v183
      %v203 = vadd.f32 %v193, %v186
      %v204 = vmul.f32 %v200, 0.799
      %v205 = vmul.f32 %v201, 0.799
      %v206 = vsub.f32 %v202, %v204
      %v207 = vsub.f32 %v203, %v205
      %vm208 = vcmp.ge.f32.partialorder %v206, 0.799
      %vm209 = vcmp.ge.f32.partialorder %v207, 0.799
      %v210 = vsel %vm208, 1.0, 0.0
      %v211 = vsel %vm209, 1.0, 0.0
      %212 = vst [vmem:[%s145] sm:$0xff] %v210
      %213 = vst [vmem:[%s145 + $0x8] sm:$0xff] %v211
      %s214 = smul.u32 2, %s13
      %p215 = scmp.lt.s32.totalorder %s214, 15
      %s216 = scalar_select %p215, %s214, 15
      %s217 = smul.addr %s216, 8
      %s218 = scalar_lea.vmem %s2, %s217
      // Predicated region
      $region29: #{new_spike_low.1} parent=27 // pred_check
        %p219 = pneg %p78
      $region30: #{new_spike_low.1} parent=27 // pred_check_branch
        %221 = sbr.rel (%p219) target = $region32
      $region31: #{new_spike_low.1} parent=27 // pred_region
        %s222 = smul.u32 2, %s13
      $region32: #{new_spike_low.1} parent=27 // pred_fallthru
        _
    $region28: #{new_spike_low.1} parent=5 // pred_fallthru
      _
    %p223 = scmp.le.s32.totalorder 2, %s8
    // Predicated region
    $region33: #{new_spike_low.1} parent=5 // pred_check
      %p224 = pneg %p223
    $region34: #{new_spike_low.1} parent=5 // pred_check_branch
      %226 = sbr.rel (%p224) target = $region36
    $region35: #{new_spike_low.1} parent=5 // pred_region
      %s227 = ssub.s32 %s8, 2
      // Predicated region
      $region37: #{new_spike_low.1} parent=35 // pred_check
        %p228 = pneg %p84
      $region38: #{new_spike_low.1} parent=35 // pred_check_branch
        %230 = sbr.rel (%p228) target = $region40
      $region39: #{new_spike_low.1} parent=35 // pred_region
        %s231 = smul.u32 2, %s14
        %p232 = scmp.lt.s32.totalorder %s231, 15
        %s233 = scalar_select %p232, %s231, 15
        %s234 = smul.addr %s233, 8
        %s235 = scalar_lea.vmem %s2, %s234
      $region40: #{new_spike_low.1} parent=35 // pred_fallthru
        _
    $region36: #{new_spike_low.1} parent=5 // pred_fallthru
      _
  $region6: #{new_spike_low.1} parent=0 // loop_footer
    %s12 = sadd.s32 1, %s8
  $region7: #{new_spike_low.1} parent=0 // loop_footer_branch
    %7 = sbr.rel target = $region3
  $region8: #{new_spike_low.1} parent=0 // loop_exit
    _

</llo_original>
